<compile_context>
chip_gen: v7x
topology: tpu7x:2x2x1
jax: 0.10.0
libtpu: 0.0.40
codegen_flags: <defaults>
</compile_context>

<pallas_src>
import math
import functools

import jax
import jax.numpy as jnp
from jax import lax
from jax.experimental import pallas as pl
from jax.experimental.pallas import tpu as pltpu


def _round_up(a: int, b: int) -> int:
    return (a + b - 1) // b * b


def _cos_margin_kernel(x_ref, w_ref, label_ref, out_ref, *, s, m, tile_c,
                       matmul_dtype):
    # F.normalize computes x / max(||x||, eps) with eps = 1e-12;
    # rsqrt(max(sumsq, eps**2)) is the same quantity (sqrt is monotone).
    eps2 = 1e-24

    x = x_ref[...]                                    # (TILE_B, Dp) f32
    w = w_ref[...]                                    # (TILE_C, Dp) f32

    # Un-normalized logits: contract on the last (lane) dim of BOTH operands so
    # the MXU is fed straight from the stored layout (no transpose, no wn copy).
    raw = lax.dot_general(
        x.astype(matmul_dtype), w.astype(matmul_dtype),
        (((1,), (1,)), ((), ())),
        preferred_element_type=jnp.float32)           # (TILE_B, TILE_C)

    # 1/||x|| per row as a column vector (lane-broadcast in the scale below).
    x_inv = lax.rsqrt(jnp.maximum(
        jnp.sum(x * x, axis=-1, keepdims=True), eps2))        # (TILE_B, 1)

    # 1/||w|| per class, produced directly in ROW layout: ones(1,D) @ (w*w)
    # keeps the reduction on the MXU and avoids an XLU transpose of a column.
    w_sq = w * w
    w_ss_row = lax.dot_general(
        jnp.ones((1, w.shape[1]), jnp.float32), w_sq,
        (((1,), (1,)), ((), ())),
        preferred_element_type=jnp.float32)                   # (1, TILE_C)
    w_inv = lax.rsqrt(jnp.maximum(w_ss_row, eps2))            # (1, TILE_C)

    cosine = raw * x_inv * w_inv                              # (TILE_B, TILE_C)

    # One-hot margin: global class id of local column c is j*TILE_C + c.
    # Label entries of -1 (label=None path / batch padding) match no class.
    j = pl.program_id(0)
    col = lax.broadcasted_iota(jnp.int32, cosine.shape, 1) + j * tile_c
    one_hot = col == label_ref[...]                           # (TILE_B, TILE_C)

    out_ref[...] = (jnp.where(one_hot, cosine - m, cosine) * s).astype(
        out_ref.dtype)


def cos_margin_product(x, weight, label=None, *, s=30.0, m=0.4,
                       matmul_dtype=jnp.float32):
    """x: (B, in_features), weight: (out_features, in_features),
    label: (B,) int32 or None.  Returns (B, out_features) f32."""
    B, D = x.shape
    C, D2 = weight.shape
    assert D == D2

    # Lane/sublane-aligned padded shapes and class/batch tiles.
    d_pad = _round_up(D, 128)
    tile_b = min(256, _round_up(B, 8))
    b_pad = _round_up(B, tile_b)
    tile_c = min(512, _round_up(C, 128))
    c_pad = _round_up(C, tile_c)

    x_p = jnp.zeros((b_pad, d_pad), jnp.float32).at[:B, :D].set(
        x.astype(jnp.float32))
    w_p = jnp.zeros((c_pad, d_pad), jnp.float32).at[:C, :D].set(
        weight.astype(jnp.float32))
    lab = jnp.full((b_pad, 1), -1, dtype=jnp.int32)
    if label is not None:
        lab = lab.at[:B, 0].set(label.reshape(B).astype(jnp.int32))

    n_c = c_pad // tile_c
    n_b = b_pad // tile_b

    kernel = functools.partial(_cos_margin_kernel, s=float(s), m=float(m),
                               tile_c=tile_c, matmul_dtype=matmul_dtype)

    # VMEM budget: double-buffered tiles plus slack; stay under v7x's 64 MiB.
    per_step = 4 * (tile_b * d_pad + tile_c * d_pad + tile_b * tile_c
                    + tile_b * 128)
    vmem_limit = int(min(max(4 * per_step, 32 * 1024 * 1024),
                         64 * 1024 * 1024))

    cost = pl.CostEstimate(
        flops=2 * b_pad * c_pad * d_pad,
        transcendentals=b_pad * n_c + c_pad * n_b,            # rsqrt's
        bytes_accessed=4 * (n_c * b_pad * d_pad + c_pad * d_pad
                            + b_pad * c_pad))

    out_padded = pl.pallas_call(
        kernel,
        out_shape=jax.ShapeDtypeStruct((b_pad, c_pad), jnp.float32),
        grid_spec=pltpu.PrefetchScalarGridSpec(
            num_scalar_prefetch=0,
            # class tiles outermost -> each weight tile fetched from HBM once,
            # reused across all batch tiles.
            grid=(n_c, n_b),
            in_specs=[
                pl.BlockSpec((tile_b, d_pad), lambda j, i: (i, 0)),   # x
                pl.BlockSpec((tile_c, d_pad), lambda j, i: (j, 0)),   # weight
                pl.BlockSpec((tile_b, 1), lambda j, i: (i, 0)),       # label
            ],
            out_specs=pl.BlockSpec((tile_b, tile_c), lambda j, i: (i, j)),
        ),
        compiler_params=pltpu.CompilerParams(
            dimension_semantics=("parallel", "parallel"),
            vmem_limit_bytes=vmem_limit),
        cost_estimate=cost,
    )(x_p, w_p, lab)

    return out_padded[:B, :C]


def _reference(x, weight, label, s, m):
    xn = x / jnp.maximum(jnp.linalg.norm(x, axis=-1, keepdims=True), 1e-12)
    wn = weight / jnp.maximum(
        jnp.linalg.norm(weight, axis=-1, keepdims=True), 1e-12)
    cosine = xn @ wn.T
    phi = cosine - m
    one_hot = jax.nn.one_hot(label, weight.shape[0], dtype=cosine.dtype)
    return jnp.where(one_hot > 0, phi, cosine) * s


if __name__ == "__main__":
    key = jax.random.PRNGKey(0)
    k_x, k_w, k_l = jax.random.split(key, 3)

    batch = 8
    in_features = 32
    out_features = 16
    s, m = 30.0, 0.4

    x = jax.random.normal(k_x, (batch, in_features), dtype=jnp.float32)

    # xavier_uniform init for weight (out_features, in_features), deterministic
    bound = math.sqrt(6.0 / (in_features + out_features))
    weight = jax.random.uniform(
        k_w, (out_features, in_features), dtype=jnp.float32,
        minval=-bound, maxval=bound)

    label = jax.random.randint(k_l, (batch,), 0, out_features, dtype=jnp.int32)

    # f32 MXU path (tight tolerance vs. reference).
    out = jax.block_until_ready(cos_margin_product(x, weight, label, s=s, m=m))
    ref = _reference(x, weight, label, s, m)
    assert out.shape == (batch, out_features)
    assert jnp.allclose(out, ref, atol=1e-4, rtol=1e-4), "mismatch vs reference"

    # label=None path (pure scaled cosine).
    out_none = jax.block_until_ready(cos_margin_product(x, weight, None, s=s, m=m))
    ref_none = (x / jnp.linalg.norm(x, axis=-1, keepdims=True)) @ (
        weight / jnp.linalg.norm(weight, axis=-1, keepdims=True)).T * s
    assert jnp.allclose(out_none, ref_none, atol=1e-4, rtol=1e-4)

    # bf16 MXU-operand fast path (v6e/v7x); accumulation and epilogue stay f32.
    out_bf16 = jax.block_until_ready(
        cos_margin_product(x, weight, label, s=s, m=m,
                           matmul_dtype=jnp.bfloat16))
    assert jnp.allclose(out_bf16, ref, atol=0.5, rtol=0.05), "bf16 path mismatch"

    print("KERNEL_OK")
</pallas_src>

<mosaic_0001>
module attributes {stable_mosaic.version = 11 : i64} {
  func.func @_cos_margin_kernel(%arg0: i32, %arg1: i32, %arg2: memref<8x128xf32, #tpu.memory_space<vmem>>, %arg3: memref<128x128xf32, #tpu.memory_space<vmem>>, %arg4: memref<8x1xi32, #tpu.memory_space<vmem>>, %arg5: memref<8x128xf32, #tpu.memory_space<vmem>>) attributes {dimension_semantics = [#tpu.dimension_semantics<parallel>, #tpu.dimension_semantics<parallel>], iteration_bounds = array<i64: 1, 1>, scalar_prefetch = 0 : i64, scratch_operands = 0 : i64, tpu.core_type = #tpu.core_type<tc>, window_params = [{transform_indices = @transform_0, window_bounds = array<i64: 8, 128>}, {transform_indices = @transform_1, window_bounds = array<i64: 128, 128>}, {transform_indices = @transform_2, window_bounds = array<i64: 8, 1>}, {transform_indices = @transform_3, window_bounds = array<i64: 8, 128>}]} {
    %c0 = arith.constant 0 : index
    %c0_0 = arith.constant 0 : index
    %0 = vector.load %arg2[%c0, %c0_0] : memref<8x128xf32, #tpu.memory_space<vmem>>, vector<8x128xf32>
    %c0_1 = arith.constant 0 : index
    %c0_2 = arith.constant 0 : index
    %1 = vector.load %arg3[%c0_1, %c0_2] : memref<128x128xf32, #tpu.memory_space<vmem>>, vector<128x128xf32>
    %cst = arith.constant dense<0.000000e+00> : vector<8x128xf32>
    %2 = tpu.matmul %0, %1, %cst {dimension_numbers = #tpu.dot_dimension_numbers<[1], [1], [0], [0], [0, 0, 1, 0], [], []>} : vector<8x128xf32>, vector<128x128xf32>, vector<8x128xf32> -> vector<8x128xf32>
    %3 = arith.mulf %0, %0 : vector<8x128xf32>
    %cst_3 = arith.constant dense<0.000000e+00> : vector<8xf32>
    %4 = vector.multi_reduction <add>, %3, %cst_3 [1] : vector<8x128xf32> to vector<8xf32>
    %5 = vector.shape_cast %4 : vector<8xf32> to vector<8x1xf32>
    %cst_4 = arith.constant 1.000000e-24 : f32
    %6 = vector.broadcast %cst_4 : f32 to vector<8x1xf32>
    %7 = arith.maximumf %5, %6 : vector<8x1xf32>
    %8 = math.rsqrt %7 : vector<8x1xf32>
    %9 = arith.mulf %1, %1 : vector<128x128xf32>
    %cst_5 = arith.constant 1.000000e+00 : f32
    %10 = vector.broadcast %cst_5 : f32 to vector<1x128xf32>
    %cst_6 = arith.constant dense<0.000000e+00> : vector<1x128xf32>
    %11 = tpu.matmul %10, %9, %cst_6 {dimension_numbers = #tpu.dot_dimension_numbers<[1], [1], [0], [0], [0, 0, 1, 0], [], []>} : vector<1x128xf32>, vector<128x128xf32>, vector<1x128xf32> -> vector<1x128xf32>
    %cst_7 = arith.constant 1.000000e-24 : f32
    %12 = vector.broadcast %cst_7 : f32 to vector<1x128xf32>
    %13 = arith.maximumf %11, %12 : vector<1x128xf32>
    %14 = math.rsqrt %13 : vector<1x128xf32>
    %15 = vector.broadcast %8 : vector<8x1xf32> to vector<8x128xf32>
    %16 = arith.mulf %2, %15 : vector<8x128xf32>
    %17 = vector.broadcast %14 : vector<1x128xf32> to vector<8x128xf32>
    %18 = arith.mulf %16, %17 : vector<8x128xf32>
    %19 = tpu.iota {dimensions = array<i32: 1>} : vector<8x128xi32>
    %c128_i32 = arith.constant 128 : i32
    %20 = arith.muli %arg0, %c128_i32 : i32
    %21 = vector.broadcast %20 : i32 to vector<8x128xi32>
    %22 = arith.addi %19, %21 : vector<8x128xi32>
    %c0_8 = arith.constant 0 : index
    %c0_9 = arith.constant 0 : index
    %23 = vector.load %arg4[%c0_8, %c0_9] : memref<8x1xi32, #tpu.memory_space<vmem>>, vector<8x1xi32>
    %24 = vector.broadcast %23 : vector<8x1xi32> to vector<8x128xi32>
    %25 = arith.cmpi eq, %22, %24 : vector<8x128xi32>
    %cst_10 = arith.constant 4.000000e-01 : f32
    %26 = vector.broadcast %cst_10 : f32 to vector<8x128xf32>
    %27 = arith.subf %18, %26 : vector<8x128xf32>
    %28 = arith.select %25, %27, %18 : vector<8x128xi1>, vector<8x128xf32>
    %cst_11 = arith.constant 3.000000e+01 : f32
    %29 = vector.broadcast %cst_11 : f32 to vector<8x128xf32>
    %30 = arith.mulf %28, %29 : vector<8x128xf32>
    %c0_12 = arith.constant 0 : index
    %c0_13 = arith.constant 0 : index
    %31 = vector.load %arg5[%c0_12, %c0_13] : memref<8x128xf32, #tpu.memory_space<vmem>>, vector<8x128xf32>
    tpu.vector_store %arg5[%c0_12, %c0_13], %30 {strides = array<i32>} : memref<8x128xf32, #tpu.memory_space<vmem>>, vector<8x128xf32>,
    return
  }
  func.func @transform_0(%arg0: i32, %arg1: i32) -> (i32, i32) {
    %c0_i32 = arith.constant 0 : i32
    %c0_i32_0 = arith.constant 0 : i32
    return %arg1, %c0_i32 : i32, i32
  }
  func.func @transform_1(%arg0: i32, %arg1: i32) -> (i32, i32) {
    %c0_i32 = arith.constant 0 : i32
    %c0_i32_0 = arith.constant 0 : i32
    return %arg0, %c0_i32 : i32, i32
  }
  func.func @transform_2(%arg0: i32, %arg1: i32) -> (i32, i32) {
    %c0_i32 = arith.constant 0 : i32
    %c0_i32_0 = arith.constant 0 : i32
    return %arg1, %c0_i32 : i32, i32
  }
  func.func @transform_3(%arg0: i32, %arg1: i32) -> (i32, i32) {
    %c0_i32 = arith.constant 0 : i32
    return %arg1, %arg0 : i32, i32
  }
}

</mosaic_0001>

<llo_original>
// kernel: tpu_custom_call.1
$region0: #{tpu_custom_call.1}
  #allocation0 [shape = 'u32[]', space=smem, size = 0x4, offset = 0x4, fixed_abs, tag = 'smem constant byte address 0x4 - core index']
  #allocation1 [shape = 'u32[144,128]{1,0:T(1,128)}', space=vmem, size = 0x12000, scoped, tag = 'internal scratch']
  %s0 = inlined_call_operand.vmem [shape: f32[8,128], index: 0, kind: input, shape index: {}]
  %s1 = inlined_call_operand.hbm [shape: f32[128,128], index: 1, kind: input, shape index: {}]
  %s2 = inlined_call_operand.vmem [shape: s32[8,1], index: 2, kind: input, shape index: {}]
  %s3 = inlined_call_operand.hbm [shape: f32[8,128], index: 3, kind: output, shape index: {}]
  %s4 = sld [smem:[#allocation0]]
  $region26: #{tpu_custom_call.1} parent=0
    _
  %s6 = ssub.s32 1, %s4
  %s7 = scalar_select 0, %s6, %s4
  $region1: #{tpu_custom_call.1} parent=0
    #allocation2 [shape = 'u8[65536]{0}', space=vmem, size = 0x10000, scoped, tag = 'input window, operand 1, single buffered']
    #allocation3 [shape = 's32[1]{0}', space=sflag, size = 0x4, scoped, tag = 'scoped memory for tpu_custom_call.1']
    #allocation4 [shape = 's32[1]{0}', space=sflag, size = 0x4, scoped, tag = 'scoped memory for tpu_custom_call.1']
    #allocation5 [shape = 'u8[4096]{0}', space=vmem, size = 0x1000, scoped, tag = 'output window, operand 0, single buffered']
    %8 = vsyncpa [#allocation3], 0
    %9 = vsyncpa [#allocation4], 0
    // Predicated region
    $region2: #{tpu_custom_call.1} parent=1 // pred_check
      _
    $region3: #{tpu_custom_call.1} parent=1 // pred_check_branch
      %11 = sbr.rel (0) target = $region5
    $region4: #{tpu_custom_call.1} parent=1 // pred_region
      _
    $region5: #{tpu_custom_call.1} parent=1 // pred_fallthru
      _
    // Predicated region
    $region6: #{tpu_custom_call.1} parent=1 // pred_check
      _
    $region7: #{tpu_custom_call.1} parent=1 // pred_check_branch
      %13 = sbr.rel (0) target = $region9
    $region8: #{tpu_custom_call.1} parent=1 // pred_region
      %s15 = ssub.s32 2048, 2048
      %16 = vsyncadd [#allocation3], %s15
      %s17 = sshll.u32 [#allocation2], 4
      %s18 = int_to_ptr.vmem [resolvable:$true] %s17
      %23 = dma.hbm_to_vmem [thread:$0]  %s1, 2048, %s18, [#allocation3], 128, 128, 8
    $region9: #{tpu_custom_call.1} parent=1 // pred_fallthru
      _
    // Predicated region
    $region10: #{tpu_custom_call.1} parent=1 // pred_check
      _
    $region11: #{tpu_custom_call.1} parent=1 // pred_check_branch
      %25 = sbr.rel (0) target = $region13
    $region12: #{tpu_custom_call.1} parent=1 // pred_region
      _
    $region13: #{tpu_custom_call.1} parent=1 // pred_fallthru
      _
    // Predicated region
    $region14: #{tpu_custom_call.1} parent=1 // pred_check
      _
    $region15: #{tpu_custom_call.1} parent=1 // pred_check_branch
      %27 = sbr.rel (0) target = $region17
    $region16: #{tpu_custom_call.1} parent=1 // pred_region
      %28 = dma.done [#allocation3], 2048
    $region17: #{tpu_custom_call.1} parent=1 // pred_fallthru
      _
    %v29 = vld [vmem:[%s0] sm:$0xff]
    %v30 = vld [vmem:[#allocation2] sm:$0xff]
    %v31 = vld [vmem:[#allocation2 + $0x8] sm:$0xff]
    %v32 = vld [vmem:[#allocation2 + $0x10] sm:$0xff]
    %v33 = vld [vmem:[#allocation2 + $0x18] sm:$0xff]
    %v34 = vld [vmem:[#allocation2 + $0x20] sm:$0xff]
    %v35 = vld [vmem:[#allocation2 + $0x28] sm:$0xff]
    %v36 = vld [vmem:[#allocation2 + $0x30] sm:$0xff]
    %v37 = vld [vmem:[#allocation2 + $0x38] sm:$0xff]
    %v38 = vld [vmem:[#allocation2 + $0x40] sm:$0xff]
    %v39 = vld [vmem:[#allocation2 + $0x48] sm:$0xff]
    %v40 = vld [vmem:[#allocation2 + $0x50] sm:$0xff]
    %v41 = vld [vmem:[#allocation2 + $0x58] sm:$0xff]
    %v42 = vld [vmem:[#allocation2 + $0x60] sm:$0xff]
    %v43 = vld [vmem:[#allocation2 + $0x68] sm:$0xff]
    %v44 = vld [vmem:[#allocation2 + $0x70] sm:$0xff]
    %v45 = vld [vmem:[#allocation2 + $0x78] sm:$0xff]
    %46 = vmatprep.subr.mxu0 0.0
    %47 = vmatpush1.xpose.msra.mxu0 %v30
    %48 = vmatprep.subr.mxu0 0.0
    %49 = vmatpush1.xpose.msra.mxu0 %v31
    %50 = vmatprep.subr.mxu0 0.0
    %51 = vmatpush1.xpose.msra.mxu0 %v32
    %52 = vmatprep.subr.mxu0 0.0
    %53 = vmatpush1.xpose.msra.mxu0 %v33
    %54 = vmatprep.subr.mxu0 0.0
    %55 = vmatpush1.xpose.msra.mxu0 %v34
    %56 = vmatprep.subr.mxu0 0.0
    %57 = vmatpush1.xpose.msra.mxu0 %v35
    %58 = vmatprep.subr.mxu0 0.0
    %59 = vmatpush1.xpose.msra.mxu0 %v36
    %60 = vmatprep.subr.mxu0 0.0
    %61 = vmatpush1.xpose.msra.mxu0 %v37
    %62 = vmatprep.subr.mxu0 0.0
    %63 = vmatpush1.xpose.msra.mxu0 %v38
    %64 = vmatprep.subr.mxu0 0.0
    %65 = vmatpush1.xpose.msra.mxu0 %v39
    %66 = vmatprep.subr.mxu0 0.0
    %67 = vmatpush1.xpose.msra.mxu0 %v40
    %68 = vmatprep.subr.mxu0 0.0
    %69 = vmatpush1.xpose.msra.mxu0 %v41
    %70 = vmatprep.subr.mxu0 0.0
    %71 = vmatpush1.xpose.msra.mxu0 %v42
    %72 = vmatprep.subr.mxu0 0.0
    %73 = vmatpush1.xpose.msra.mxu0 %v43
    %74 = vmatprep.subr.mxu0 0.0
    %75 = vmatpush1.xpose.msra.mxu0 %v44
    %76 = vmatprep.subr.mxu0 0.0
    %77 = vmatpush1.xpose.msra.mxu0 %v45
    %78 = vmatprep.subr.mxu0 0.0
    %79 = vmatpush1.xpose.msra.mxu0 0.0
    %80 = vmatprep.subr.mxu0 0.0
    %81 = vmatpush1.xpose.msra.mxu0 0.0
    %82 = vmatprep.subr.mxu0 0.0
    %83 = vmatpush1.xpose.msra.mxu0 0.0
    %84 = vmatprep.subr.mxu0 0.0
    %85 = vmatpush1.xpose.msra.mxu0 0.0
    %86 = vmatprep.subr.mxu0 0.0
    %87 = vmatpush1.xpose.msra.mxu0 0.0
    %88 = vmatprep.subr.mxu0 0.0
    %89 = vmatpush1.xpose.msra.mxu0 0.0
    %90 = vmatprep.subr.mxu0 0.0
    %91 = vmatpush1.xpose.msra.mxu0 0.0
    %92 = vmatprep.subr.mxu0 0.0
    %93 = vmatpush1.xpose.msra.mxu0 0.0
    %94 = vmatprep.subr.mxu0 0.0
    %95 = vmatpush1.xpose.msra.mxu0 0.0
    %96 = vmatprep.subr.mxu0 0.0
    %97 = vmatpush1.xpose.msra.mxu0 0.0
    %98 = vmatprep.subr.mxu0 0.0
    %99 = vmatpush1.xpose.msra.mxu0 0.0
    %100 = vmatprep.subr.mxu0 0.0
    %101 = vmatpush1.xpose.msra.mxu0 0.0
    %102 = vmatprep.subr.mxu0 0.0
    %103 = vmatpush1.xpose.msra.mxu0 0.0
    %104 = vmatprep.subr.mxu0 0.0
    %105 = vmatpush1.xpose.msra.mxu0 0.0
    %106 = vmatprep.subr.mxu0 0.0
    %107 = vmatpush1.xpose.msra.mxu0 0.0
    %108 = vmatprep.subr.mxu0 0.0
    %109 = vmatpush1.xpose.msra.mxu0 0.0
    %110 = vmatprep.mubr.f32.mxu0 0.0
    %111 = vmatmul.mubr.f32.gmra.mrb[0].mxu0 %v29
    %v112 = vpop.f32.mrb[0].mxu0
    %v113 = vadd.f32 0.0, %v112
    %v114 = vpop.f32.mrb[0].mxu0
    %115 = vdwg.mxu0
    %v116 = vmul.f32 %v29, %v29
    %117 = vadd.xlane.f32.xlu0 %v116
    %v118 = vpop.xlane.xlu0 %117
    %v119 = vmax.f32 %v118, 1e-24
    %v120 = vrsqrt.pop %v119
    %v121 = vmul.f32 %v30, %v30
    %v122 = vmul.f32 %v31, %v31
    %v123 = vmul.f32 %v32, %v32
    %v124 = vmul.f32 %v33, %v33
    %v125 = vmul.f32 %v34, %v34
    %v126 = vmul.f32 %v35, %v35
    %v127 = vmul.f32 %v36, %v36
    %v128 = vmul.f32 %v37, %v37
    %v129 = vmul.f32 %v38, %v38
    %v130 = vmul.f32 %v39, %v39
    %v131 = vmul.f32 %v40, %v40
    %v132 = vmul.f32 %v41, %v41
    %v133 = vmul.f32 %v42, %v42
    %v134 = vmul.f32 %v43, %v43
    %v135 = vmul.f32 %v44, %v44
    %v136 = vmul.f32 %v45, %v45
    %137 = vmatprep.subr.mxu0 0.0
    %138 = vmatpush1.xpose.msra.mxu0 %v121
    %139 = vmatprep.subr.mxu0 0.0
    %140 = vmatpush1.xpose.msra.mxu0 %v122
    %141 = vmatprep.subr.mxu0 0.0
    %142 = vmatpush1.xpose.msra.mxu0 %v123
    %143 = vmatprep.subr.mxu0 0.0
    %144 = vmatpush1.xpose.msra.mxu0 %v124
    %145 = vmatprep.subr.mxu0 0.0
    %146 = vmatpush1.xpose.msra.mxu0 %v125
    %147 = vmatprep.subr.mxu0 0.0
    %148 = vmatpush1.xpose.msra.mxu0 %v126
    %149 = vmatprep.subr.mxu0 0.0
    %150 = vmatpush1.xpose.msra.mxu0 %v127
    %151 = vmatprep.subr.mxu0 0.0
    %152 = vmatpush1.xpose.msra.mxu0 %v128
    %153 = vmatprep.subr.mxu0 0.0
    %154 = vmatpush1.xpose.msra.mxu0 %v129
    %155 = vmatprep.subr.mxu0 0.0
    %156 = vmatpush1.xpose.msra.mxu0 %v130
    %157 = vmatprep.subr.mxu0 0.0
    %158 = vmatpush1.xpose.msra.mxu0 %v131
    %159 = vmatprep.subr.mxu0 0.0
    %160 = vmatpush1.xpose.msra.mxu0 %v132
    %161 = vmatprep.subr.mxu0 0.0
    %162 = vmatpush1.xpose.msra.mxu0 %v133
    %163 = vmatprep.subr.mxu0 0.0
    %164 = vmatpush1.xpose.msra.mxu0 %v134
    %165 = vmatprep.subr.mxu0 0.0
    %166 = vmatpush1.xpose.msra.mxu0 %v135
    %167 = vmatprep.subr.mxu0 0.0
    %168 = vmatpush1.xpose.msra.mxu0 %v136
    %169 = vmatprep.subr.mxu0 0.0
    %170 = vmatpush1.xpose.msra.mxu0 0.0
    %171 = vmatprep.subr.mxu0 0.0
    %172 = vmatpush1.xpose.msra.mxu0 0.0
    %173 = vmatprep.subr.mxu0 0.0
    %174 = vmatpush1.xpose.msra.mxu0 0.0
    %175 = vmatprep.subr.mxu0 0.0
    %176 = vmatpush1.xpose.msra.mxu0 0.0
    %177 = vmatprep.subr.mxu0 0.0
    %178 = vmatpush1.xpose.msra.mxu0 0.0
    %179 = vmatprep.subr.mxu0 0.0
    %180 = vmatpush1.xpose.msra.mxu0 0.0
    %181 = vmatprep.subr.mxu0 0.0
    %182 = vmatpush1.xpose.msra.mxu0 0.0
    %183 = vmatprep.subr.mxu0 0.0
    %184 = vmatpush1.xpose.msra.mxu0 0.0
    %185 = vmatprep.subr.mxu0 0.0
    %186 = vmatpush1.xpose.msra.mxu0 0.0
    %187 = vmatprep.subr.mxu0 0.0
    %188 = vmatpush1.xpose.msra.mxu0 0.0
    %189 = vmatprep.subr.mxu0 0.0
    %190 = vmatpush1.xpose.msra.mxu0 0.0
    %191 = vmatprep.subr.mxu0 0.0
    %192 = vmatpush1.xpose.msra.mxu0 0.0
    %193 = vmatprep.subr.mxu0 0.0
    %194 = vmatpush1.xpose.msra.mxu0 0.0
    %195 = vmatprep.subr.mxu0 0.0
    %196 = vmatpush1.xpose.msra.mxu0 0.0
    %197 = vmatprep.subr.mxu0 0.0
    %198 = vmatpush1.xpose.msra.mxu0 0.0
    %199 = vmatprep.subr.mxu0 0.0
    %200 = vmatpush1.xpose.msra.mxu0 0.0
    %201 = vmatprep.mubr.f32.mxu0 0.0
    %202 = vmatmul.mubr.f32.gmra.mrb[0].mxu0 1.0
    %v203 = vpop.f32.mrb[0].mxu0
    %v204 = vadd.f32 0.0, %v203
    %v205 = vpop.f32.mrb[0].mxu0
    %206 = vdwg.mxu0
    %v207 = vmax.f32 %v204, 1e-24
    %v208 = vrsqrt.pop %v207
    %v209 = vmul.f32 %v113, %v120
    %v210 = vlaneseq
    %v211 = vshrl.u32 %v210, 7
    %v212 = vsub.s32 0, %v211
    %v213 = vrot.slane %v208, %v212
    %v214 = vmul.f32 %v209, %v213
    %v215 = vlaneseq
    %v216 = vand.u32 %v215, 127
    %s217 = smul.u32 0, 128
    %v218 = vstv %s217
    %v219 = vadd.s32 %v216, %v218
    %v220 = vld [vmem:[%s2] sm:$0xff]
    %221 = vset.pattern.permute.xlu0 0
    %222 = vperm.xlu0 %221, %v220
    %v223 = vpop.permute.xlu0 %222
    %vm224 = vcmp.eq.s32.totalorder %v219, %v223
    %v225 = vsub.f32 %v214, 0.4
    %v226 = vsel %vm224, %v225, %v214
    %v227 = vmul.f32 %v226, 30.0
    %228 = vst [vmem:[#allocation5] sm:$0xff] %v227
    // Predicated region
    $region18: #{tpu_custom_call.1} parent=1 // pred_check
      _
    $region19: #{tpu_custom_call.1} parent=1 // pred_check_branch
      %230 = sbr.rel (0) target = $region21
    $region20: #{tpu_custom_call.1} parent=1 // pred_region
      %s232 = ssub.s32 128, 128
      %233 = vsyncadd [#allocation4], %s232
      %s235 = sshll.u32 [#allocation5], 4
      %s236 = int_to_ptr.vmem [resolvable:$true] %s235
      %238 = dma.vmem_to_hbm [thread:$0]  %s236, 128, %s3, [#allocation4]
    $region21: #{tpu_custom_call.1} parent=1 // pred_fallthru
      _
    // Predicated region
    $region22: #{tpu_custom_call.1} parent=1 // pred_check
      _
    $region23: #{tpu_custom_call.1} parent=1 // pred_check_branch
      %240 = sbr.rel (0) target = $region25
    $region24: #{tpu_custom_call.1} parent=1 // pred_region
      %241 = dma.done [#allocation4], 128
    $region25: #{tpu_custom_call.1} parent=1 // pred_fallthru
      _
    %242 = vsyncpa [#allocation3], 1
    %243 = vsyncpa [#allocation4], 1

</llo_original>
